<compile_context>
chip_gen: v7x
topology: tpu7x:2x2x1
jax: 0.10.0
libtpu: 0.0.40
codegen_flags: <defaults>
</compile_context>

<pallas_src>
import jax
import jax.numpy as jnp
from jax.experimental import pallas as pl
from jax.experimental.pallas import tpu as pltpu

_LANE = 128
_MAX_LANE_TILE = 8192  # per-block lane cap (balanced split keeps columns even)


def _round_up(x, m):
    return ((x + m - 1) // m) * m


def _sublane_for(dtype):
    # Native packed tile height: f32 -> 8, bf16 -> 16, int8/fp8 -> 32.
    itemsize = jnp.dtype(dtype).itemsize
    return max(8, 8 * (4 // max(1, itemsize)))


def _chip_config():
    """Generation-aware (vmem_budget, vmem_limit, pipeline_buffers, two_cores)."""
    budget, limit, buffers, two_cores = 12 << 20, None, 2, False
    cap = None
    kind = ""
    try:
        cap = pltpu.get_tpu_info().vmem_capacity_bytes
    except Exception:
        cap = None
    try:
        kind = jax.devices()[0].device_kind.lower()
    except Exception:
        kind = ""
    if cap is not None:
        if cap < (100 << 20):
            # Small-VMEM parts (v7x: 64 MiB / core, 2 TCs, ~3.2 TB/s HBM).
            limit = min(48 << 20, max(16 << 20, cap - (8 << 20)))
            budget = max(8 << 20, limit // 2)
            buffers = 3          # keep the fast DMA engine continuously fed
            two_cores = True     # guarantee >=2 blocks so both TCs stream HBM
        elif ("v5 lite" in kind) or ("v5e" in kind) or ("v5litepod" in kind):
            # v5e: 128 MiB physical but 16 MiB scoped default; be explicit and
            # leave Mosaic internal-scratch headroom.
            budget, limit, buffers = 12 << 20, 24 << 20, 2
        else:
            # v6e-class 128 MiB parts: the most slack; bigger blocks.
            budget, limit, buffers = 22 << 20, 44 << 20, 2
    return budget, limit, buffers, two_cores


def _pick_tiles(rows, lanes, x_itemsize, sublane, buffers, budget):
    """(row_tile, lane_tile) by VMEM byte budget with balanced lane splitting."""
    # Lane tile: full-dim when it fits, else a balanced 128-multiple split
    # (avoids a near-empty trailing lane column paying full per-step overhead).
    if lanes <= _MAX_LANE_TILE:
        tl = lanes
    else:
        nsplit = pl.cdiv(lanes, _MAX_LANE_TILE)
        tl = _round_up(pl.cdiv(lanes, nsplit), _LANE)
    lane_pad = _round_up(tl, _LANE)

    # Row tile by budget: x in + out blocks (`buffers`-deep) plus the
    # lane-padded fused scale/shift block (double-buffered, small).
    per_row = 2 * buffers * lane_pad * x_itemsize + 2 * _LANE * 4
    tm_cap = max(sublane, (budget // per_row) // sublane * sublane)
    if rows <= sublane:
        tm = rows  # full-dim escape hatch for tiny row counts
    else:
        tm = min((rows // sublane) * sublane, tm_cap)
    return tm, tl


def _ensure_multi_block(rows, lanes, tm, tl, sublane):
    """On 2-TensorCore chips, make sure the parallel grid has >= 2 blocks."""
    if pl.cdiv(rows, tm) * pl.cdiv(lanes, tl) >= 2:
        return tm, tl
    if rows > sublane:
        new_tm = _round_up(pl.cdiv(rows, 2), sublane)
        if new_tm < rows:
            return new_tm, tl
    if lanes > _LANE:
        new_tl = _round_up(pl.cdiv(lanes, 2), _LANE)
        if new_tl < lanes:
            return tm, new_tl
    return tm, tl


def _bn_rows_kernel(x_ref, ss_ref, o_ref):
    # ss_ref: (TM, 2) fused per-row [scale, shift]; broadcast across lanes.
    ss = ss_ref[...]
    y = x_ref[...] * ss[:, 0:1] + ss[:, 1:2]
    o_ref[...] = y.astype(o_ref.dtype)


def _bn_lanes_kernel(x_ref, ss_ref, o_ref):
    # ss_ref: (2, TL) fused per-lane [scale; shift]; broadcast across sublanes.
    ss = ss_ref[...]
    y = x_ref[...] * ss[0:1, :] + ss[1:2, :]
    o_ref[...] = y.astype(o_ref.dtype)


def frozen_batch_norm_2d(x, weight, bias, running_mean, running_var,
                         eps=1e-05, *, donate_x=False):
    """x: (N, C, H, W); params: (C,). Matches PyTorch FrozenBatchNorm2d.forward."""
    N, C, H, W = x.shape
    HW = H * W

    # Fold the frozen stats/affine into per-channel scale/shift once
    # (negligible (C,)-sized XLA work, kept in f32 for accuracy).
    scale_c = (weight.astype(jnp.float32)
               * jax.lax.rsqrt(running_var.astype(jnp.float32) + eps))
    shift_c = bias.astype(jnp.float32) - running_mean.astype(jnp.float32) * scale_c

    budget, vmem_limit, buffers, two_cores = _chip_config()
    sublane = _sublane_for(x.dtype)
    itemsize = jnp.dtype(x.dtype).itemsize

    lane_dense_small = HW < _LANE
    if lane_dense_small:
        # Small feature maps (7x7 / 14x14): flatten (C,H,W) into the lane dim
        # so stores stay lane-dense (>=128 lanes for real layers). NCHW is
        # contiguous, so this reshape costs nothing.
        rows, lanes = N, C * HW
        x2d = x.reshape(rows, lanes)
        ss = jnp.stack([jnp.repeat(scale_c, HW),
                        jnp.repeat(shift_c, HW)], axis=0)      # (2, C*HW)
        kernel = _bn_lanes_kernel
    else:
        # Large feature maps: one row per (n, c); lanes = H*W.
        rows, lanes = N * C, HW
        x2d = x.reshape(rows, lanes)
        ss = jnp.stack([jnp.tile(scale_c, N),
                        jnp.tile(shift_c, N)], axis=1)          # (N*C, 2)
        kernel = _bn_rows_kernel

    TM, TL = _pick_tiles(rows, lanes, itemsize, sublane, buffers, budget)
    if two_cores:
        TM, TL = _ensure_multi_block(rows, lanes, TM, TL, sublane)
    grid = (pl.cdiv(rows, TM), pl.cdiv(lanes, TL))

    # Deeper pipelining only where there is headroom (v7x); default elsewhere.
    x_pipe = {"pipeline_mode": pl.Buffered(buffers)} if buffers != 2 else {}
    x_spec = pl.BlockSpec((TM, TL), lambda i, j: (i, j), **x_pipe)
    out_spec = pl.BlockSpec((TM, TL), lambda i, j: (i, j), **x_pipe)
    if lane_dense_small:
        ss_spec = pl.BlockSpec((2, TL), lambda i, j: (0, j))
    else:
        ss_spec = pl.BlockSpec((TM, 2), lambda i, j: (i, 0))

    compiler_kwargs = dict(dimension_semantics=("parallel", "parallel"))
    if vmem_limit is not None:
        compiler_kwargs["vmem_limit_bytes"] = int(vmem_limit)

    out2d = pl.pallas_call(
        kernel,
        out_shape=jax.ShapeDtypeStruct((rows, lanes), x.dtype),
        grid_spec=pltpu.PrefetchScalarGridSpec(
            num_scalar_prefetch=0,
            grid=grid,
            in_specs=[x_spec, ss_spec],
            out_specs=out_spec,
        ),
        compiler_params=pltpu.CompilerParams(**compiler_kwargs),
        # Donating x avoids a second full-size HBM activation buffer when the
        # caller no longer needs x (off by default; the test reuses x).
        input_output_aliases=({0: 0} if donate_x else {}),
    )(x2d, ss)

    return out2d.reshape(N, C, H, W)


def _reference(x, weight, bias, running_mean, running_var, eps=1e-05):
    C = weight.shape[0]
    scale = (weight * jax.lax.rsqrt(running_var + eps)).reshape(1, C, 1, 1)
    shift = bias.reshape(1, C, 1, 1) - running_mean.reshape(1, C, 1, 1) * scale
    return x * scale + shift


if __name__ == "__main__":
    key = jax.random.PRNGKey(0)

    def make_case(k, N, C, H, W):
        kx, kw, kb, km, kv = jax.random.split(k, 5)
        x = jax.random.normal(kx, (N, C, H, W), dtype=jnp.float32)
        weight = jnp.ones((C,), jnp.float32) + 0.1 * jax.random.normal(kw, (C,))
        bias = 0.1 * jax.random.normal(kb, (C,))
        running_mean = 0.1 * jax.random.normal(km, (C,))
        running_var = jnp.ones((C,), jnp.float32) + 0.1 * jax.random.uniform(kv, (C,))
        return x, weight, bias, running_mean, running_var

    k0, k1 = jax.random.split(key)

    # Primary small case: N=2, C=4, H=W=16 (HW = 256 >= 128 -> per-row path).
    args0 = make_case(k0, 2, 4, 16, 16)
    out0 = jax.block_until_ready(frozen_batch_norm_2d(*args0))
    assert jnp.allclose(out0, _reference(*args0), atol=1e-6, rtol=1e-6), \
        "mismatch vs reference (case 0)"

    # Small-feature-map case: HW = 49 < 128 -> lane-dense (N, C*H*W) path
    # (also exercises a non-multiple-of-128 lane extent and odd channel count).
    args1 = make_case(k1, 2, 5, 7, 7)
    out1 = jax.block_until_ready(frozen_batch_norm_2d(*args1))
    assert jnp.allclose(out1, _reference(*args1), atol=1e-6, rtol=1e-6), \
        "mismatch vs reference (case 1)"

    print("KERNEL_OK")
</pallas_src>

<mosaic_0001>
module attributes {stable_mosaic.version = 11 : i64} {
  func.func @_bn_rows_kernel(%arg0: i32, %arg1: i32, %arg2: memref<8x256xf32, #tpu.memory_space<vmem>>, %arg3: memref<8x2xf32, #tpu.memory_space<vmem>>, %arg4: memref<8x256xf32, #tpu.memory_space<vmem>>) attributes {dimension_semantics = [#tpu.dimension_semantics<parallel>, #tpu.dimension_semantics<parallel>], iteration_bounds = array<i64: 1, 1>, scalar_prefetch = 0 : i64, scratch_operands = 0 : i64, tpu.core_type = #tpu.core_type<tc>, window_params = [{transform_indices = @transform_0, window_bounds = array<i64: 8, 256>}, {transform_indices = @transform_1, window_bounds = array<i64: 8, 2>}, {transform_indices = @transform_2, window_bounds = array<i64: 8, 256>}]} {
    %c0 = arith.constant 0 : index
    %c0_0 = arith.constant 0 : index
    %0 = vector.load %arg3[%c0, %c0_0] : memref<8x2xf32, #tpu.memory_space<vmem>>, vector<8x2xf32>
    %c0_1 = arith.constant 0 : index
    %c0_2 = arith.constant 0 : index
    %1 = vector.load %arg2[%c0_1, %c0_2] : memref<8x256xf32, #tpu.memory_space<vmem>>, vector<8x256xf32>
    %2 = vector.extract_strided_slice %0 {offsets = [0, 0], sizes = [8, 1], strides = [1, 1]} : vector<8x2xf32> to vector<8x1xf32>
    %3 = vector.broadcast %2 : vector<8x1xf32> to vector<8x256xf32>
    %4 = arith.mulf %1, %3 : vector<8x256xf32>
    %5 = vector.extract_strided_slice %0 {offsets = [0, 1], sizes = [8, 1], strides = [1, 1]} : vector<8x2xf32> to vector<8x1xf32>
    %6 = vector.broadcast %5 : vector<8x1xf32> to vector<8x256xf32>
    %7 = arith.addf %4, %6 : vector<8x256xf32>
    %c0_3 = arith.constant 0 : index
    %c0_4 = arith.constant 0 : index
    %8 = vector.load %arg4[%c0_3, %c0_4] : memref<8x256xf32, #tpu.memory_space<vmem>>, vector<8x256xf32>
    tpu.vector_store %arg4[%c0_3, %c0_4], %7 {strides = array<i32>} : memref<8x256xf32, #tpu.memory_space<vmem>>, vector<8x256xf32>,
    return
  }
  func.func @transform_0(%arg0: i32, %arg1: i32) -> (i32, i32) {
    %c0_i32 = arith.constant 0 : i32
    return %arg0, %arg1 : i32, i32
  }
  func.func @transform_1(%arg0: i32, %arg1: i32) -> (i32, i32) {
    %c0_i32 = arith.constant 0 : i32
    %c0_i32_0 = arith.constant 0 : i32
    return %arg0, %c0_i32 : i32, i32
  }
  func.func @transform_2(%arg0: i32, %arg1: i32) -> (i32, i32) {
    %c0_i32 = arith.constant 0 : i32
    return %arg0, %arg1 : i32, i32
  }
}

</mosaic_0001>

<llo_original>
// kernel: tpu_custom_call.1
$region0: #{tpu_custom_call.1}
  #allocation0 [shape = 'u32[]', space=smem, size = 0x4, offset = 0x4, fixed_abs, tag = 'smem constant byte address 0x4 - core index']
  #allocation1 [shape = 'u32[144,128]{1,0:T(1,128)}', space=vmem, size = 0x12000, scoped, tag = 'internal scratch']
  %s0 = inlined_call_operand.hbm [shape: f32[8,256], index: 0, kind: input, shape index: {}]
  %s1 = inlined_call_operand.vmem [shape: f32[8,2], index: 1, kind: input, shape index: {}]
  %s2 = inlined_call_operand.hbm [shape: f32[8,256], index: 2, kind: output, shape index: {}]
  %s3 = sld [smem:[#allocation0]]
  $region22: #{tpu_custom_call.1} parent=0
    _
  %s5 = ssub.s32 1, %s3
  %s6 = scalar_select 0, %s5, %s3
  $region1: #{tpu_custom_call.1} parent=0
    #allocation2 [shape = 'u8[8192]{0}', space=vmem, size = 0x2000, scoped, tag = 'input window, operand 0, single buffered']
    #allocation3 [shape = 's32[1]{0}', space=sflag, size = 0x4, scoped, tag = 'scoped memory for tpu_custom_call.1']
    #allocation4 [shape = 's32[1]{0}', space=sflag, size = 0x4, scoped, tag = 'scoped memory for tpu_custom_call.1']
    #allocation5 [shape = 'u8[8192]{0}', space=vmem, size = 0x2000, scoped, tag = 'output window, operand 0, single buffered']
    %7 = vsyncpa [#allocation3], 0
    %8 = vsyncpa [#allocation4], 0
    // Predicated region
    $region2: #{tpu_custom_call.1} parent=1 // pred_check
      _
    $region3: #{tpu_custom_call.1} parent=1 // pred_check_branch
      %10 = sbr.rel (0) target = $region5
    $region4: #{tpu_custom_call.1} parent=1 // pred_region
      %s12 = ssub.s32 256, 256
      %13 = vsyncadd [#allocation3], %s12
      %s15 = sshll.u32 [#allocation2], 4
      %s16 = int_to_ptr.vmem [resolvable:$true] %s15
      %18 = dma.hbm_to_vmem [thread:$0]  %s0, 256, %s16, [#allocation3]
    $region5: #{tpu_custom_call.1} parent=1 // pred_fallthru
      _
    // Predicated region
    $region6: #{tpu_custom_call.1} parent=1 // pred_check
      _
    $region7: #{tpu_custom_call.1} parent=1 // pred_check_branch
      %20 = sbr.rel (0) target = $region9
    $region8: #{tpu_custom_call.1} parent=1 // pred_region
      _
    $region9: #{tpu_custom_call.1} parent=1 // pred_fallthru
      _
    // Predicated region
    $region10: #{tpu_custom_call.1} parent=1 // pred_check
      _
    $region11: #{tpu_custom_call.1} parent=1 // pred_check_branch
      %22 = sbr.rel (0) target = $region13
    $region12: #{tpu_custom_call.1} parent=1 // pred_region
      %23 = dma.done [#allocation3], 256
    $region13: #{tpu_custom_call.1} parent=1 // pred_fallthru
      _
    %v24 = vld [vmem:[%s1] sm:$0xff]
    %v25 = vld [vmem:[#allocation2] sm:$0xff]
    %v26 = vld [vmem:[#allocation2 + $0x8] sm:$0xff]
    %28 = vset.pattern.permute.xlu0 0
    %29 = vperm.xlu0 %28, %v24
    %v30 = vpop.permute.xlu0 %29
    %v32 = vmul.f32 %v25, %v30
    %v33 = vmul.f32 %v26, %v30
    %34 = vset.pattern.permute.xlu0 1
    %35 = vperm.xlu0 %34, %v24
    %v36 = vpop.permute.xlu0 %35
    %v38 = vadd.f32 %v32, %v36
    %v39 = vadd.f32 %v33, %v36
    %40 = vst [vmem:[#allocation5] sm:$0xff] %v38
    %41 = vst [vmem:[#allocation5 + $0x8] sm:$0xff] %v39
    // Predicated region
    $region14: #{tpu_custom_call.1} parent=1 // pred_check
      _
    $region15: #{tpu_custom_call.1} parent=1 // pred_check_branch
      %43 = sbr.rel (0) target = $region17
    $region16: #{tpu_custom_call.1} parent=1 // pred_region
      %s45 = ssub.s32 256, 256
      %46 = vsyncadd [#allocation4], %s45
      %s48 = sshll.u32 [#allocation5], 4
      %s49 = int_to_ptr.vmem [resolvable:$true] %s48
      %51 = dma.vmem_to_hbm [thread:$0]  %s49, 256, %s2, [#allocation4]
    $region17: #{tpu_custom_call.1} parent=1 // pred_fallthru
      _
    // Predicated region
    $region18: #{tpu_custom_call.1} parent=1 // pred_check
      _
    $region19: #{tpu_custom_call.1} parent=1 // pred_check_branch
      %53 = sbr.rel (0) target = $region21
    $region20: #{tpu_custom_call.1} parent=1 // pred_region
      %54 = dma.done [#allocation4], 256
    $region21: #{tpu_custom_call.1} parent=1 // pred_fallthru
      _
    %55 = vsyncpa [#allocation3], 1
    %56 = vsyncpa [#allocation4], 1

</llo_original>
